<compile_context>
chip_gen: v7x
topology: tpu7x:2x2x1
jax: 0.10.0
libtpu: 0.0.40
codegen_flags: <defaults>
</compile_context>

<pallas_src>
import functools

import jax
import jax.numpy as jnp
from jax.experimental import pallas as pl
from jax.experimental.pallas import tpu as pltpu

NEG_SLOPE = 0.01          # nn.LeakyReLU default slope ('lrelu' activation)
GN_EPS = 1e-5             # nn.GroupNorm default eps
VMEM_LIMIT = 64 << 20     # raise scoped-VMEM ceiling (defaults: 16/32 MiB)


# ---------------------------------------------------------------------------
# Kernel 1: pairwise negative squared distance, tiled over query rows
# ---------------------------------------------------------------------------
def _pairwise_kernel(q_ref, x_ref, o_ref):
    q = q_ref[0]                                               # (tm, D)
    xb = x_ref[0]                                              # (N,  D)
    inner = 2.0 * jax.lax.dot_general(
        q, xb, (((1,), (1,)), ((), ())),
        preferred_element_type=jnp.float32)                    # (tm, N)
    q_sq = jnp.sum(q * q, axis=-1, keepdims=True)              # (tm, 1)
    ones_row = jnp.ones((1, xb.shape[-1]), jnp.float32)
    x_sq_row = jax.lax.dot_general(                            # row-vector ||xj||^2
        ones_row, xb * xb, (((1,), (1,)), ((), ())),
        preferred_element_type=jnp.float32)                    # (1, N)
    o_ref[0] = inner - q_sq - x_sq_row                         # -||qi - xj||^2


def pairwise_neg_dist(x_cl, row_tile=256):
    # Kept in f32: the result only feeds top_k (knn index selection) and the
    # matmul is over D=3, so bf16 buys nothing but could perturb neighbor order.
    B, N, D = x_cl.shape
    tm = row_tile if (N > row_tile and N % row_tile == 0) else N
    return pl.pallas_call(
        _pairwise_kernel,
        out_shape=jax.ShapeDtypeStruct((B, N, N), jnp.float32),
        grid=(B, N // tm),
        in_specs=[
            pl.BlockSpec((1, tm, D), lambda b, t: (b, t, 0)),   # query row tile
            pl.BlockSpec((1, N, D), lambda b, t: (b, 0, 0)),    # full cloud (keys)
        ],
        out_specs=pl.BlockSpec((1, tm, N), lambda b, t: (b, t, 0)),
        compiler_params=pltpu.CompilerParams(
            dimension_semantics=("parallel", "parallel"),
            vmem_limit_bytes=VMEM_LIMIT),
    )(x_cl, x_cl)                                              # same array, two views


# ---------------------------------------------------------------------------
# Kernel 2: edge conv block = one big matmul + GroupNorm + LeakyReLU + max_k
# ---------------------------------------------------------------------------
def _edge_conv_kernel(neigh_ref, x_ref, wt_ref, wd_ref, b_ref, gam_ref,
                      bet_ref, gmap_ref, o_ref, *, K, G, eps, neg_slope):
    neigh = neigh_ref[0]                                       # (K*N, Cin) bf16
    xb = x_ref[0]                                              # (N,   Cin) bf16
    wt = wt_ref[...]                                           # (Cin, Cout) bf16
    wd = wd_ref[...]                                           # (Cin, Cout) bf16

    # y_k = (neigh_k - x) @ W_top + x @ W_bot + b
    #     = neigh_k @ W_top + x @ (W_bot - W_top) + b
    base = jnp.dot(xb, wd, preferred_element_type=jnp.float32) + b_ref[...]     # (N, C)
    y = jnp.dot(neigh, wt, preferred_element_type=jnp.float32)                  # (K*N, C)
    KN, C = y.shape
    N = KN // K
    y3 = y.reshape(K, N, C) + base[None]                       # (K, N, C) f32

    # GroupNorm over (K, N, channels-in-group); two-pass (centered) variance.
    gmap = gmap_ref[...]                                       # (C, G) one-hot
    cnt = float(K * N * (C // G))
    col_sum = jnp.sum(jnp.sum(y3, axis=0), axis=0, keepdims=True)        # (1, C)
    g_mean = jnp.dot(col_sum, gmap, preferred_element_type=jnp.float32) / cnt
    mean_c = jax.lax.dot_general(g_mean, gmap, (((1,), (1,)), ((), ())),
                                 preferred_element_type=jnp.float32)     # (1, C)
    d = y3 - mean_c[None]                                      # (K, N, C)
    col_sq = jnp.sum(jnp.sum(d * d, axis=0), axis=0, keepdims=True)      # (1, C)
    g_var = jnp.dot(col_sq, gmap, preferred_element_type=jnp.float32) / cnt
    inv_c = jax.lax.dot_general(jax.lax.rsqrt(g_var + eps), gmap,
                                (((1,), (1,)), ((), ())),
                                preferred_element_type=jnp.float32)      # (1, C)

    out = d * (inv_c * gam_ref[...])[None] + bet_ref[...][None]
    out = jnp.where(out > 0, out, neg_slope * out)             # LeakyReLU
    o_ref[0] = jnp.max(out, axis=0)                            # max over k -> (N, C)


def edge_conv_block(neigh, x, w, b, gamma, beta, gmap, k, num_group):
    # neigh: (B, k*N, Cin) bf16 (k-major);  x: (B, N, Cin) bf16
    # w: (2*Cin, Cout) f32 ordered as torch cat((neigh - x, x)).
    B, N, Cin = x.shape
    Cout = w.shape[1]
    w_top = w[:Cin].astype(jnp.bfloat16)
    w_delta = (w[Cin:] - w[:Cin]).astype(jnp.bfloat16)
    kern = functools.partial(_edge_conv_kernel, K=k, G=num_group,
                             eps=GN_EPS, neg_slope=NEG_SLOPE)
    return pl.pallas_call(
        kern,
        out_shape=jax.ShapeDtypeStruct((B, N, Cout), jnp.float32),
        grid=(B,),
        in_specs=[
            pl.BlockSpec((1, k * N, Cin), lambda bb: (bb, 0, 0)),
            pl.BlockSpec((1, N, Cin), lambda bb: (bb, 0, 0)),
            pl.BlockSpec((Cin, Cout), lambda bb: (0, 0)),
            pl.BlockSpec((Cin, Cout), lambda bb: (0, 0)),
            pl.BlockSpec((1, Cout), lambda bb: (0, 0)),
            pl.BlockSpec((1, Cout), lambda bb: (0, 0)),
            pl.BlockSpec((1, Cout), lambda bb: (0, 0)),
            pl.BlockSpec((Cout, num_group), lambda bb: (0, 0)),
        ],
        out_specs=pl.BlockSpec((1, N, Cout), lambda bb: (bb, 0, 0)),
        compiler_params=pltpu.CompilerParams(
            dimension_semantics=("parallel",),
            vmem_limit_bytes=VMEM_LIMIT),
    )(neigh, x, w_top, w_delta, b, gamma, beta, gmap)


# ---------------------------------------------------------------------------
# Kernel 3: final conv1d (1x1) + GroupNorm + LeakyReLU + global max/avg pool
# ---------------------------------------------------------------------------
def _conv1d_pool_kernel(x_ref, w_ref, b_ref, gam_ref, bet_ref, gmap_ref,
                        mx_ref, av_ref, *, G, eps, neg_slope):
    xb = x_ref[0]                                              # (N, Cin) bf16
    y = jnp.dot(xb, w_ref[...], preferred_element_type=jnp.float32) + b_ref[...]
    N, C = y.shape
    gmap = gmap_ref[...]                                       # (C, G)
    cnt = float(N * (C // G))
    col_sum = jnp.sum(y, axis=0, keepdims=True)                # (1, C)
    g_mean = jnp.dot(col_sum, gmap, preferred_element_type=jnp.float32) / cnt
    mean_c = jax.lax.dot_general(g_mean, gmap, (((1,), (1,)), ((), ())),
                                 preferred_element_type=jnp.float32)
    d = y - mean_c
    col_sq = jnp.sum(d * d, axis=0, keepdims=True)
    g_var = jnp.dot(col_sq, gmap, preferred_element_type=jnp.float32) / cnt
    inv_c = jax.lax.dot_general(jax.lax.rsqrt(g_var + eps), gmap,
                                (((1,), (1,)), ((), ())),
                                preferred_element_type=jnp.float32)
    yn = d * (inv_c * gam_ref[...]) + bet_ref[...]
    yn = jnp.where(yn > 0, yn, neg_slope * yn)
    mx_ref[0] = jnp.max(yn, axis=0, keepdims=True)             # adaptive_max_pool1d(.,1)
    av_ref[0] = jnp.mean(yn, axis=0, keepdims=True)            # adaptive_avg_pool1d(.,1)


def conv1d_pool(x, w, b, gamma, beta, gmap, num_group):
    B, N, Cin = x.shape
    Cout = w.shape[1]
    kern = functools.partial(_conv1d_pool_kernel, G=num_group,
                             eps=GN_EPS, neg_slope=NEG_SLOPE)
    mx, av = pl.pallas_call(
        kern,
        out_shape=(jax.ShapeDtypeStruct((B, 1, Cout), jnp.float32),
                   jax.ShapeDtypeStruct((B, 1, Cout), jnp.float32)),
        grid=(B,),
        in_specs=[
            pl.BlockSpec((1, N, Cin), lambda bb: (bb, 0, 0)),
            pl.BlockSpec((Cin, Cout), lambda bb: (0, 0)),
            pl.BlockSpec((1, Cout), lambda bb: (0, 0)),
            pl.BlockSpec((1, Cout), lambda bb: (0, 0)),
            pl.BlockSpec((1, Cout), lambda bb: (0, 0)),
            pl.BlockSpec((Cout, num_group), lambda bb: (0, 0)),
        ],
        out_specs=(pl.BlockSpec((1, 1, Cout), lambda bb: (bb, 0, 0)),
                   pl.BlockSpec((1, 1, Cout), lambda bb: (bb, 0, 0))),
        compiler_params=pltpu.CompilerParams(
            dimension_semantics=("parallel",),
            vmem_limit_bytes=VMEM_LIMIT),
    )(x, w, b, gamma, beta, gmap)
    return mx[:, 0, :], av[:, 0, :]                            # (B, Cout) each


# ---------------------------------------------------------------------------
# Kernel 4: FC head   (Linear -> LeakyReLU)* -> Linear, fused in one kernel
# ---------------------------------------------------------------------------
def _fc_head_kernel(*refs, n_layers, neg_slope):
    x_ref = refs[0]
    o_ref = refs[-1]
    h = x_ref[...]                                             # (B, C0) bf16
    for i in range(n_layers):
        w = refs[1 + 2 * i][...]                               # (Ci, Ci+1) bf16
        b = refs[2 + 2 * i][...]                               # (1, Ci+1) f32
        h = jnp.dot(h.astype(jnp.bfloat16), w,
                    preferred_element_type=jnp.float32) + b
        if i < n_layers - 1:                                   # last DenseBlock: no act
            h = jnp.where(h > 0, h, neg_slope * h)
    o_ref[...] = h


def fc_head(x, fc_params):
    B = x.shape[0]
    out_c = fc_params[-1]['w'].shape[1]
    args = [x.astype(jnp.bfloat16)]
    for p in fc_params:
        args.append(p['w'].astype(jnp.bfloat16))
        args.append(p['b'])
    kern = functools.partial(_fc_head_kernel, n_layers=len(fc_params),
                             neg_slope=NEG_SLOPE)
    return pl.pallas_call(
        kern,
        out_shape=jax.ShapeDtypeStruct((B, out_c), jnp.float32),
        compiler_params=pltpu.CompilerParams(vmem_limit_bytes=VMEM_LIMIT),
    )(*args)


# ---------------------------------------------------------------------------
# JAX-side glue (knn top-k + gather), parameters, full forward
# ---------------------------------------------------------------------------
def group_map(num_channels, num_group):
    cg = num_channels // num_group
    return (jnp.arange(num_channels)[:, None] // cg
            == jnp.arange(num_group)[None, :]).astype(jnp.float32)   # (C, G)


def get_graph_feature(x_cl, k):
    # x_cl: (B, N, C) f32.  Returns:
    #   neigh : (B, k*N, C) bf16, k-major (neighbor features only; the
    #           (neigh - center, center) concat of torch is folded into the
    #           edge-conv weights inside edge_conv_block)
    #   center: (B, N, C)   bf16
    # TODO(synk): the kNN top_k + index gather stay in host JAX; a Pallas
    #             version would need a manual DMA gather (data-dependent).
    B, N, C = x_cl.shape
    neg_dist = pairwise_neg_dist(x_cl)                         # Pallas kernel
    _, idx = jax.lax.top_k(neg_dist, k)                        # (B, N, k) knn indices
    x_bf = x_cl.astype(jnp.bfloat16)
    neigh = jax.vmap(lambda xb, ib: xb[ib])(x_bf, idx)         # (B, N, k, C)
    neigh = jnp.transpose(neigh, (0, 2, 1, 3)).reshape(B, k * N, C)
    return neigh, x_bf


def init_params(key, point_dim, conv_channels, fc_channels, num_group):
    chans = [point_dim] + conv_channels
    keys = list(jax.random.split(key, 64))
    it = iter(keys)

    def conv_block(cin, cout):
        return dict(
            w=0.1 * jax.random.normal(next(it), (cin, cout), jnp.float32),
            b=0.05 * jax.random.normal(next(it), (1, cout), jnp.float32),
            gamma=1.0 + 0.05 * jax.random.normal(next(it), (1, cout), jnp.float32),
            beta=0.05 * jax.random.normal(next(it), (1, cout), jnp.float32),
            gmap=group_map(cout, num_group),
        )

    edge = [conv_block(chans[i] * 2, chans[i + 1]) for i in range(len(chans) - 2)]
    conv1d = conv_block(sum(conv_channels[:-1]), chans[-1])

    fcs = [chans[-1] * 2] + fc_channels
    fc = []
    for i in range(len(fcs) - 1):
        fc.append(dict(
            w=0.1 * jax.random.normal(next(it), (fcs[i], fcs[i + 1]), jnp.float32),
            b=0.05 * jax.random.normal(next(it), (1, fcs[i + 1]), jnp.float32),
        ))
    return dict(edge=edge, conv1d=conv1d, fc=fc)


def dgcnn_encoder_forward(points, params, k, num_group):
    # points: (B, N, point_dim); channels-last throughout (torch transposes to
    # (B, C, N), we don't need to).  z_count == 1, pointwise == False.
    x = points.astype(jnp.float32)
    res = []
    for p in params['edge']:                                   # conv[:-1]
        neigh, ctr = get_graph_feature(x, k)
        x = edge_conv_block(neigh, ctr, p['w'], p['b'], p['gamma'], p['beta'],
                            p['gmap'], k, num_group)           # (B, N, Cout), max_k fused
        res.append(x)
    xcat = jnp.concatenate(res, axis=-1)                       # (B, N, sum(conv_channels[:-1]))

    p = params['conv1d']
    mx, av = conv1d_pool(xcat.astype(jnp.bfloat16), p['w'].astype(jnp.bfloat16),
                         p['b'], p['gamma'], p['beta'], p['gmap'], num_group)
    pooled = jnp.concatenate([mx, av], axis=-1)                # (B, 2*C_last) max first, avg second

    out = fc_head(pooled, params['fc'])                        # (B, fc_channels[-1])
    return out                                                 # z_count == 1


if __name__ == "__main__":
    B, N, point_dim = 2, 64, 3
    k = 8
    conv_channels = [8, 8, 16, 32]
    fc_channels = [32, 16]
    num_group = 4

    key = jax.random.PRNGKey(0)
    pkey, xkey = jax.random.split(key)
    params = init_params(pkey, point_dim, conv_channels, fc_channels, num_group)
    points = jax.random.normal(xkey, (B, N, point_dim), dtype=jnp.float32)

    out = dgcnn_encoder_forward(points, params, k=k, num_group=num_group)
    out = jax.block_until_ready(out)
    assert out.shape == (B, fc_channels[-1]), out.shape
    assert bool(jnp.all(jnp.isfinite(out)))
    print("KERNEL_OK")
</pallas_src>

<mosaic_0001>
module attributes {stable_mosaic.version = 11 : i64} {
  func.func @_pairwise_kernel(%arg0: i32, %arg1: i32, %arg2: memref<1x64x3xf32, #tpu.memory_space<vmem>>, %arg3: memref<1x64x3xf32, #tpu.memory_space<vmem>>, %arg4: memref<1x64x64xf32, #tpu.memory_space<vmem>>) attributes {dimension_semantics = [#tpu.dimension_semantics<parallel>, #tpu.dimension_semantics<parallel>], iteration_bounds = array<i64: 2, 1>, scalar_prefetch = 0 : i64, scratch_operands = 0 : i64, tpu.core_type = #tpu.core_type<tc>, window_params = [{transform_indices = @transform_0, window_bounds = array<i64: 1, 64, 3>}, {transform_indices = @transform_1, window_bounds = array<i64: 1, 64, 3>}, {transform_indices = @transform_2, window_bounds = array<i64: 1, 64, 64>}]} {
    %c0 = arith.constant 0 : index
    %c0_0 = arith.constant 0 : index
    %c0_1 = arith.constant 0 : index
    %0 = vector.load %arg2[%c0, %c0_0, %c0_1] : memref<1x64x3xf32, #tpu.memory_space<vmem>>, vector<1x64x3xf32>
    %1 = vector.shape_cast %0 : vector<1x64x3xf32> to vector<64x3xf32>
    %c0_2 = arith.constant 0 : index
    %c0_3 = arith.constant 0 : index
    %c0_4 = arith.constant 0 : index
    %2 = vector.load %arg3[%c0_2, %c0_3, %c0_4] : memref<1x64x3xf32, #tpu.memory_space<vmem>>, vector<1x64x3xf32>
    %3 = vector.shape_cast %2 : vector<1x64x3xf32> to vector<64x3xf32>
    %cst = arith.constant dense<0.000000e+00> : vector<64x64xf32>
    %4 = tpu.matmul %1, %3, %cst {dimension_numbers = #tpu.dot_dimension_numbers<[1], [1], [0], [0], [0, 0, 1, 0], [], []>} : vector<64x3xf32>, vector<64x3xf32>, vector<64x64xf32> -> vector<64x64xf32>
    %cst_5 = arith.constant 2.000000e+00 : f32
    %5 = vector.broadcast %cst_5 : f32 to vector<64x64xf32>
    %6 = arith.mulf %5, %4 : vector<64x64xf32>
    %7 = arith.mulf %1, %1 : vector<64x3xf32>
    %cst_6 = arith.constant dense<0.000000e+00> : vector<64xf32>
    %8 = vector.multi_reduction <add>, %7, %cst_6 [1] : vector<64x3xf32> to vector<64xf32>
    %9 = vector.shape_cast %8 : vector<64xf32> to vector<64x1xf32>
    %cst_7 = arith.constant 1.000000e+00 : f32
    %10 = vector.broadcast %cst_7 : f32 to vector<1x3xf32>
    %11 = arith.mulf %3, %3 : vector<64x3xf32>
    %cst_8 = arith.constant dense<0.000000e+00> : vector<1x64xf32>
    %12 = tpu.matmul %10, %11, %cst_8 {dimension_numbers = #tpu.dot_dimension_numbers<[1], [1], [0], [0], [0, 0, 1, 0], [], []>} : vector<1x3xf32>, vector<64x3xf32>, vector<1x64xf32> -> vector<1x64xf32>
    %13 = vector.broadcast %9 : vector<64x1xf32> to vector<64x64xf32>
    %14 = arith.subf %6, %13 : vector<64x64xf32>
    %15 = vector.broadcast %12 : vector<1x64xf32> to vector<64x64xf32>
    %16 = arith.subf %14, %15 : vector<64x64xf32>
    %c0_9 = arith.constant 0 : index
    %c0_10 = arith.constant 0 : index
    %c0_11 = arith.constant 0 : index
    %17 = vector.load %arg4[%c0_9, %c0_10, %c0_11] : memref<1x64x64xf32, #tpu.memory_space<vmem>>, vector<1x64x64xf32>
    %18 = vector.shape_cast %17 : vector<1x64x64xf32> to vector<64x64xf32>
    %19 = vector.shape_cast %16 : vector<64x64xf32> to vector<1x64x64xf32>
    tpu.vector_store %arg4[%c0_9, %c0_10, %c0_11], %19 {strides = array<i32>} : memref<1x64x64xf32, #tpu.memory_space<vmem>>, vector<1x64x64xf32>,
    return
  }
  func.func @transform_0(%arg0: i32, %arg1: i32) -> (i32, i32, i32) {
    %c0_i32 = arith.constant 0 : i32
    %c0_i32_0 = arith.constant 0 : i32
    return %arg0, %arg1, %c0_i32 : i32, i32, i32
  }
  func.func @transform_1(%arg0: i32, %arg1: i32) -> (i32, i32, i32) {
    %c0_i32 = arith.constant 0 : i32
    %c0_i32_0 = arith.constant 0 : i32
    %c0_i32_1 = arith.constant 0 : i32
    return %arg0, %c0_i32, %c0_i32_0 : i32, i32, i32
  }
  func.func @transform_2(%arg0: i32, %arg1: i32) -> (i32, i32, i32) {
    %c0_i32 = arith.constant 0 : i32
    %c0_i32_0 = arith.constant 0 : i32
    return %arg0, %arg1, %c0_i32 : i32, i32, i32
  }
}

</mosaic_0001>

<llo_original>
// kernel: tpu_custom_call.1
$region0: #{tpu_custom_call.1}
  #allocation0 [shape = 'u32[]', space=smem, size = 0x4, offset = 0x4, fixed_abs, tag = 'smem constant byte address 0x4 - core index']
  #allocation1 [shape = 'u32[144,128]{1,0:T(1,128)}', space=vmem, size = 0x12000, scoped, tag = 'internal scratch']
  %s0 = inlined_call_operand.hbm [shape: f32[2,64,3], index: 0, kind: input, shape index: {}]
  %s1 = inlined_call_operand.hbm [shape: f32[2,64,3], index: 1, kind: input, shape index: {}]
  %s2 = inlined_call_operand.hbm [shape: f32[2,64,64], index: 2, kind: output, shape index: {}]
  %s3 = sld [smem:[#allocation0]]
  $region49: #{tpu_custom_call.1} parent=0
    _
  %s5 = ssub.s32 1, %s3
  %s6 = scalar_select 0, %s5, %s3
  $region1: #{tpu_custom_call.1} parent=0
    #allocation2 [shape = 'u8[65536]{0}', space=vmem, size = 0x10000, scoped, tag = 'input window, operand 0']
    #allocation3 [shape = 's32[2]{0}', space=sflag, size = 0x8, scoped, tag = 'scoped memory for tpu_custom_call.1']
    #allocation4 [shape = 's32[2]{0}', space=sflag, size = 0x8, scoped, tag = 'scoped memory for tpu_custom_call.1']
    #allocation5 [shape = 'u8[65536]{0}', space=vmem, size = 0x10000, scoped, tag = 'input window, operand 1']
    #allocation6 [shape = 's32[2]{0}', space=sflag, size = 0x8, scoped, tag = 'scoped memory for tpu_custom_call.1']
    #allocation7 [shape = 'u8[65536]{0}', space=vmem, size = 0x10000, scoped, tag = 'output window, operand 0']
    %7 = vsyncpa [#allocation3], 0
    %s8 = scalar_lea.sflag [#allocation3], 1
    %9 = vsyncpa %s8, 0
    %10 = vsyncpa [#allocation6], 0
    %s11 = scalar_lea.sflag [#allocation6], 1
    %12 = vsyncpa %s11, 0
    %13 = vsyncpa [#allocation4], 0
    %s14 = scalar_lea.sflag [#allocation4], 1
    %15 = vsyncpa %s14, 0
    loop: start=0, step=1, limit=4
    $region2: #{tpu_custom_call.1} parent=1 // loop_pre_header
      _
    $region3: #{tpu_custom_call.1} parent=1 // loop_header
      %s17 = sphi 0, %s21
      %p18 = scmp.ge.s32.totalorder %s17, 4
      %s24 = sphi 0, %s36
      %s25 = sphi 0, %s32
      %s26 = sphi 0, %s24
      %s27 = sphi 0, %s25
      %s28 = sphi 0, %s26
      %s29 = sphi 0, %s27
      %s41 = sphi 0, %s43
      %s44 = sphi 0, %s41
      %s45 = sphi 0, %s44
      %s61 = sphi 0, %s45
      %s67 = sphi 0, %s69
      %s70 = sphi 0, %s67
      %s71 = sphi 0, %s70
      %s87 = sphi 0, %s71
      %s95 = sphi 0, %s97
      %s98 = sphi 0, %s95
      %s99 = sphi 0, %s98
      %s115 = sphi 0, %s99
    $region4: #{tpu_custom_call.1} parent=1 // loop_header_branch
      %20 = sbr.rel (%p18) target = $region8
    $region5: #{tpu_custom_call.1} parent=1 // loop_body
      %s22 = ssub.s32 %s17, 1
      %s23 = ssub.s32 %s17, 2
      %s30 = sadd.s32 1, %s25
      %p31 = scmp.ge.s32.totalorder %s30, 1
      %s32 = scalar_select %p31, 0, %s30
      %s33 = sadd.s32 1, %s24
      %s34 = scalar_select %p31, %s33, %s24
      %p35 = scmp.ge.s32.totalorder %s34, 2
      %s36 = scalar_select %p35, 0, %s34
      %s37 = ssub.s32 %s24, %s36
      %s38 = ssub.s32 %s25, %s32
      %s39 = sor.u32 %s37, %s38
      %p40 = scmp.eq.s32.totalorder %s39, 0
      %s42 = sadd.s32 %s41, 1
      %s43 = scalar_select %p40, %s41, %s42
      %p46 = pneg %p40
      %p47 = scmp.eq.s32.totalorder %s17, 1
      %p48 = por %p46, %p47
      %p49 = scmp.ne.s32.totalorder %s41, %s44
      %p50 = scmp.eq.s32.totalorder %s17, 0
      %p51 = por %p49, %p50
      %p52 = scmp.ne.s32.totalorder %s41, %s44
      %p53 = scmp.eq.s32.totalorder %s22, 1
      %p54 = por %p52, %p53
      %p55 = scmp.ne.s32.totalorder %s44, %s45
      %p56 = scmp.eq.s32.totalorder %s22, 0
      %p57 = por %p55, %p56
      %p58 = scmp.ne.s32.totalorder %s44, %s45
      %p59 = scmp.eq.s32.totalorder %s23, 1
      %p60 = por %p58, %p59
      %p62 = scmp.ne.s32.totalorder %s45, %s61
      %p63 = scmp.eq.s32.totalorder %s23, 0
      %p64 = por %p62, %p63
      %s65 = ssub.s32 %s24, %s36
      %p66 = scmp.eq.s32.totalorder %s65, 0
      %s68 = sadd.s32 %s67, 1
      %s69 = scalar_select %p66, %s67, %s68
      %p72 = pneg %p66
      %p73 = scmp.eq.s32.totalorder %s17, 1
      %p74 = por %p72, %p73
      %p75 = scmp.ne.s32.totalorder %s67, %s70
      %p76 = scmp.eq.s32.totalorder %s17, 0
      %p77 = por %p75, %p76
      %p78 = scmp.ne.s32.totalorder %s67, %s70
      %p79 = scmp.eq.s32.totalorder %s22, 1
      %p80 = por %p78, %p79
      %p81 = scmp.ne.s32.totalorder %s70, %s71
      %p82 = scmp.eq.s32.totalorder %s22, 0
      %p83 = por %p81, %p82
      %p84 = scmp.ne.s32.totalorder %s70, %s71
      %p85 = scmp.eq.s32.totalorder %s23, 1
      %p86 = por %p84, %p85
      %p88 = scmp.ne.s32.totalorder %s71, %s87
      %p89 = scmp.eq.s32.totalorder %s23, 0
      %p90 = por %p88, %p89
      %s91 = ssub.s32 %s24, %s36
      %s92 = ssub.s32 %s25, %s32
      %s93 = sor.u32 %s91, %s92
      %p94 = scmp.eq.s32.totalorder %s93, 0
      %s96 = sadd.s32 %s95, 1
      %s97 = scalar_select %p94, %s95, %s96
      %p100 = pneg %p94
      %p101 = scmp.eq.s32.totalorder %s17, 1
      %p102 = por %p100, %p101
      %p103 = scmp.ne.s32.totalorder %s95, %s98
      %p104 = scmp.eq.s32.totalorder %s17, 0
      %p105 = por %p103, %p104
      %p106 = scmp.ne.s32.totalorder %s95, %s98
      %p107 = scmp.eq.s32.totalorder %s22, 1
      %p108 = por %p106, %p107
      %p109 = scmp.ne.s32.totalorder %s98, %s99
      %p110 = scmp.eq.s32.totalorder %s22, 0
      %p111 = por %p109, %p110
      %p112 = scmp.ne.s32.totalorder %s98, %s99
      %p113 = scmp.eq.s32.totalorder %s23, 1
      %p114 = por %p112, %p113
      %p116 = scmp.ne.s32.totalorder %s99, %s115
      %p117 = scmp.eq.s32.totalorder %s23, 0
      %p118 = por %p116, %p117
      %p119 = scmp.le.s32.totalorder 1, %s17
      %p120 = scmp.lt.s32.totalorder %s17, 3
      %p121 = pnand %p119, %p120
      %p122 = pneg %p121
      // Predicated region
      $region9: #{tpu_custom_call.1} parent=5 // pred_check
        _
      $region10: #{tpu_custom_call.1} parent=5 // pred_check_branch
        %124 = sbr.rel (%p121) target = $region12
      $region11: #{tpu_custom_call.1} parent=5 // pred_region
        %s125 = ssub.s32 %s17, 1
      $region12: #{tpu_custom_call.1} parent=5 // pred_fallthru
        _
      %p126 = scmp.lt.s32.totalorder %s17, 2
      // Predicated region
      $region13: #{tpu_custom_call.1} parent=5 // pred_check
        %p127 = pneg %p126
      $region14: #{tpu_custom_call.1} parent=5 // pred_check_branch
        %129 = sbr.rel (%p127) target = $region16
      $region15: #{tpu_custom_call.1} parent=5 // pred_region
        // Predicated region
        $region17: #{tpu_custom_call.1} parent=15 // pred_check
          %p130 = pneg %p51
        $region18: #{tpu_custom_call.1} parent=15 // pred_check_branch
          %132 = sbr.rel (%p130) target = $region20
        $region19: #{tpu_custom_call.1} parent=15 // pred_region
          %s133 = sand.u32 %s41, 1
          %s134 = scalar_lea.sflag [#allocation3], %s133
          %s135 = sand.u32 %s41, 1
          %s136 = smul.addr %s135, 64
          %s137 = scalar_lea.vmem [#allocation2], %s136
          %s138 = smul.u32 8, %s25
          %s140 = ssub.s32 1024, 1024
          %141 = vsyncadd %s134, %s140
          %s142 = smul.addr %s24, 8
          %s143 = sadd.s32 %s138, %s142
          %s144 = smul.addr %s143, 128
          %s145 = scalar_lea.hbm %s0, %s144
          %s146 = sshll.u32 %s137, 4
          %s147 = int_to_ptr.vmem [resolvable:$true] %s146
          %152 = dma.hbm_to_vmem [thread:$0]  %s145, 1024, %s147, %s134, 128, 128, 8
        $region20: #{tpu_custom_call.1} parent=15 // pred_fallthru
          _
        // Predicated region
        $region21: #{tpu_custom_call.1} parent=15 // pred_check
          %p153 = pneg %p77
        $region22: #{tpu_custom_call.1} parent=15 // pred_check_branch
          %155 = sbr.rel (%p153) target = $region24
        $region23: #{tpu_custom_call.1} parent=15 // pred_region
          %s156 = sand.u32 %s67, 1
          %s157 = scalar_lea.sflag [#allocation6], %s156
          %s158 = sand.u32 %s67, 1
          %s159 = smul.addr %s158, 64
          %s160 = scalar_lea.vmem [#allocation5], %s159
          %s162 = ssub.s32 1024, 1024
          %163 = vsyncadd %s157, %s162
          %s164 = smul.addr %s24, 8
          %s165 = smul.addr %s164, 128
          %s166 = scalar_lea.hbm %s1, %s165
          %s167 = sshll.u32 %s160, 4
          %s168 = int_to_ptr.vmem [resolvable:$true] %s167
          %173 = dma.hbm_to_vmem [thread:$0]  %s166, 1024, %s168, %s157, 128, 128, 8
        $region24: #{tpu_custom_call.1} parent=15 // pred_fallthru
          _
      $region16: #{tpu_custom_call.1} parent=5 // pred_fallthru
        _
      %p174 = scmp.le.s32.totalorder 1, %s17
      %p175 = scmp.lt.s32.totalorder %s17, 3
      %p176 = pnand %p174, %p175
      %p177 = pneg %p176
      // Predicated region
      $region25: #{tpu_custom_call.1} parent=5 // pred_check
        _
      $region26: #{tpu_custom_call.1} parent=5 // pred_check_branch
        %179 = sbr.rel (%p176) target = $region28
      $region27: #{tpu_custom_call.1} parent=5 // pred_region
        %s180 = ssub.s32 %s17, 1
        %s181 = sand.u32 %s44, 1
        %s182 = scalar_lea.sflag [#allocation3], %s181
        %s183 = sand.u32 %s44, 1
        %s184 = smul.addr %s183, 64
        %s185 = scalar_lea.vmem [#allocation2], %s184
        // Predicated region
        $region29: #{tpu_custom_call.1} parent=27 // pred_check
          %p186 = pneg %p57
        $region30: #{tpu_custom_call.1} parent=27 // pred_check_branch
          %188 = sbr.rel (%p186) target = $region32
        $region31: #{tpu_custom_call.1} parent=27 // pred_region
          %189 = dma.done %s182, 1024
        $region32: #{tpu_custom_call.1} parent=27 // pred_fallthru
          _
        %s190 = sand.u32 %s70, 1
        %s191 = scalar_lea.sflag [#allocation6], %s190
        %s192 = sand.u32 %s70, 1
        %s193 = smul.addr %s192, 64
        %s194 = scalar_lea.vmem [#allocation5], %s193
        // Predicated region
        $region33: #{tpu_custom_call.1} parent=27 // pred_check
          %p195 = pneg %p83
        $region34: #{tpu_custom_call.1} parent=27 // pred_check_branch
          %197 = sbr.rel (%p195) target = $region36
        $region35: #{tpu_custom_call.1} parent=27 // pred_region
          %198 = dma.done %s191, 1024
        $region36: #{tpu_custom_call.1} parent=27 // pred_fallthru
          _
        %s199 = sand.u32 %s44, 1
        %s200 = scalar_lea.sflag [#allocation3], %s199
        %s201 = sand.u32 %s44, 1
        %s202 = smul.addr %s201, 64
        %s203 = scalar_lea.vmem [#allocation2], %s202
        %p204 = pneg %p57
        %p205 = pneg %p54
        %s206 = sand.u32 %s70, 1
        %s207 = scalar_lea.sflag [#allocation6], %s206
        %s208 = sand.u32 %s70, 1
        %s209 = smul.addr %s208, 64
        %s210 = scalar_lea.vmem [#allocation5], %s209
        %p211 = pneg %p83
        %p212 = pneg %p80
        %p213 = pneg %p111
        %p214 = pneg %p108
        %s215 = sand.u32 %s98, 1
        %s216 = scalar_lea.sflag [#allocation4], %s215
        %s217 = sand.u32 %s98, 1
        %s218 = smul.addr %s217, 64
        %s219 = scalar_lea.vmem [#allocation7], %s218
        %s220 = smul.u32 8, %s27
        %s221 = smul.u32 8, %s27
        %v222 = vld [vmem:[%s185] sm:$0xff]
        %v223 = vld [vmem:[%s185 + $0x8] sm:$0xff]
        %v224 = vld [vmem:[%s185 + $0x10] sm:$0xff]
        %v225 = vld [vmem:[%s185 + $0x18] sm:$0xff]
        %v226 = vld [vmem:[%s185 + $0x20] sm:$0xff]
        %v227 = vld [vmem:[%s185 + $0x28] sm:$0xff]
        %v228 = vld [vmem:[%s185 + $0x30] sm:$0xff]
        %v229 = vld [vmem:[%s185 + $0x38] sm:$0xff]
        %v230 = vld [vmem:[%s194] sm:$0xff]
        %v231 = vld [vmem:[%s194 + $0x8] sm:$0xff]
        %v232 = vld [vmem:[%s194 + $0x10] sm:$0xff]
        %v233 = vld [vmem:[%s194 + $0x18] sm:$0xff]
        %v234 = vld [vmem:[%s194 + $0x20] sm:$0xff]
        %v235 = vld [vmem:[%s194 + $0x28] sm:$0xff]
        %v236 = vld [vmem:[%s194 + $0x30] sm:$0xff]
        %v237 = vld [vmem:[%s194 + $0x38] sm:$0xff]
        %vm238 = vcmask 23552
        %v240 = vsel %vm238, %v222, 0
        %v243 = vsel %vm238, %v223, 0
        %v246 = vsel %vm238, %v224, 0
        %v249 = vsel %vm238, %v225, 0
        %v252 = vsel %vm238, %v226, 0
        %v255 = vsel %vm238, %v227, 0
        %v258 = vsel %vm238, %v228, 0
        %v261 = vsel %vm238, %v229, 0
        %v264 = vsel %vm238, %v230, 0
        %v267 = vsel %vm238, %v231, 0
        %v270 = vsel %vm238, %v232, 0
        %v273 = vsel %vm238, %v233, 0
        %v276 = vsel %vm238, %v234, 0
        %v279 = vsel %vm238, %v235, 0
        %v282 = vsel %vm238, %v236, 0
        %v285 = vsel %vm238, %v237, 0
        %287 = vmatprep.subr.mxu0 0.0
        %288 = vmatpush1.xpose.msra.mxu0 %v264
        %289 = vmatprep.subr.mxu0 0.0
        %290 = vmatpush1.xpose.msra.mxu0 %v267
        %291 = vmatprep.subr.mxu0 0.0
        %292 = vmatpush1.xpose.msra.mxu0 %v270
        %293 = vmatprep.subr.mxu0 0.0
        %294 = vmatpush1.xpose.msra.mxu0 %v273
        %295 = vmatprep.subr.mxu0 0.0
        %296 = vmatpush1.xpose.msra.mxu0 %v276
        %297 = vmatprep.subr.mxu0 0.0
        %298 = vmatpush1.xpose.msra.mxu0 %v279
        %299 = vmatprep.subr.mxu0 0.0
        %300 = vmatpush1.xpose.msra.mxu0 %v282
        %301 = vmatprep.subr.mxu0 0.0
        %302 = vmatpush1.xpose.msra.mxu0 %v285
        %303 = vmatprep.subr.mxu0 0.0
        %304 = vmatpush1.xpose.msra.mxu0 0.0
        %305 = vmatprep.subr.mxu0 0.0
        %306 = vmatpush1.xpose.msra.mxu0 0.0
        %307 = vmatprep.subr.mxu0 0.0
        %308 = vmatpush1.xpose.msra.mxu0 0.0
        %309 = vmatprep.subr.mxu0 0.0
        %310 = vmatpush1.xpose.msra.mxu0 0.0
        %311 = vmatprep.subr.mxu0 0.0
        %312 = vmatpush1.xpose.msra.mxu0 0.0
        %313 = vmatprep.subr.mxu0 0.0
        %314 = vmatpush1.xpose.msra.mxu0 0.0
        %315 = vmatprep.subr.mxu0 0.0
        %316 = vmatpush1.xpose.msra.mxu0 0.0
        %317 = vmatprep.subr.mxu0 0.0
        %318 = vmatpush1.xpose.msra.mxu0 0.0
        %319 = vmatprep.subr.mxu0 0.0
        %320 = vmatpush1.xpose.msra.mxu0 0.0
        %321 = vmatprep.subr.mxu0 0.0
        %322 = vmatpush1.xpose.msra.mxu0 0.0
        %323 = vmatprep.subr.mxu0 0.0
        %324 = vmatpush1.xpose.msra.mxu0 0.0
        %325 = vmatprep.subr.mxu0 0.0
        %326 = vmatpush1.xpose.msra.mxu0 0.0
        %327 = vmatprep.subr.mxu0 0.0
        %328 = vmatpush1.xpose.msra.mxu0 0.0
        %329 = vmatprep.subr.mxu0 0.0
        %330 = vmatpush1.xpose.msra.mxu0 0.0
        %331 = vmatprep.subr.mxu0 0.0
        %332 = vmatpush1.xpose.msra.mxu0 0.0
        %333 = vmatprep.subr.mxu0 0.0
        %334 = vmatpush1.xpose.msra.mxu0 0.0
        %335 = vmatprep.subr.mxu0 0.0
        %336 = vmatpush1.xpose.msra.mxu0 0.0
        %337 = vmatprep.subr.mxu0 0.0
        %338 = vmatpush1.xpose.msra.mxu0 0.0
        %339 = vmatprep.subr.mxu0 0.0
        %340 = vmatpush1.xpose.msra.mxu0 0.0
        %341 = vmatprep.subr.mxu0 0.0
        %342 = vmatpush1.xpose.msra.mxu0 0.0
        %343 = vmatprep.subr.mxu0 0.0
        %344 = vmatpush1.xpose.msra.mxu0 0.0
        %345 = vmatprep.subr.mxu0 0.0
        %346 = vmatpush1.xpose.msra.mxu0 0.0
        %347 = vmatprep.subr.mxu0 0.0
        %348 = vmatpush1.xpose.msra.mxu0 0.0
        %349 = vmatprep.subr.mxu0 0.0
        %350 = vmatpush1.xpose.msra.mxu0 0.0
        %351 = vmatprep.mubr.f32.mxu0 0.0
        %352 = vmatmul.mubr.f32.gmra.mrb[0].mxu0 %v240
        %v353 = vpop.f32.mrb[0].mxu0
        %v354 = vadd.f32 0.0, %v353
        %v355 = vpop.f32.mrb[0].mxu0
        %356 = vmatprep.mubr.f32.mxu0 0.0
        %357 = vmatmul.mubr.f32.gmra.mrb[0].mxu0 %v243
        %v358 = vpop.f32.mrb[0].mxu0
        %v359 = vadd.f32 0.0, %v358
        %v360 = vpop.f32.mrb[0].mxu0
        %361 = vmatprep.mubr.f32.mxu0 0.0
        %362 = vmatmul.mubr.f32.gmra.mrb[0].mxu0 %v246
        %v363 = vpop.f32.mrb[0].mxu0
        %v364 = vadd.f32 0.0, %v363
        %v365 = vpop.f32.mrb[0].mxu0
        %366 = vmatprep.mubr.f32.mxu0 0.0
        %367 = vmatmul.mubr.f32.gmra.mrb[0].mxu0 %v249
        %v368 = vpop.f32.mrb[0].mxu0
        %v369 = vadd.f32 0.0, %v368
        %v370 = vpop.f32.mrb[0].mxu0
        %371 = vmatprep.mubr.f32.mxu0 0.0
        %372 = vmatmul.mubr.f32.gmra.mrb[0].mxu0 %v252
        %v373 = vpop.f32.mrb[0].mxu0
        %v374 = vadd.f32 0.0, %v373
        %v375 = vpop.f32.mrb[0].mxu0
        %376 = vmatprep.mubr.f32.mxu0 0.0
        %377 = vmatmul.mubr.f32.gmra.mrb[0].mxu0 %v255
        %v378 = vpop.f32.mrb[0].mxu0
        %v379 = vadd.f32 0.0, %v378
        %v380 = vpop.f32.mrb[0].mxu0
        %381 = vmatprep.mubr.f32.mxu0 0.0
        %382 = vmatmul.mubr.f32.gmra.mrb[0].mxu0 %v258
        %v383 = vpop.f32.mrb[0].mxu0
        %v384 = vadd.f32 0.0, %v383
        %v385 = vpop.f32.mrb[0].mxu0
        %386 = vmatprep.mubr.f32.mxu0 0.0
        %387 = vmatmul.mubr.f32.gmra.mrb[0].mxu0 %v261
        %v388 = vpop.f32.mrb[0].mxu0
        %v389 = vadd.f32 0.0, %v388
        %v390 = vpop.f32.mrb[0].mxu0
        %391 = vdwg.mxu0
        %v392 = vmul.f32 %v354, 2.0
        %v393 = vmul.f32 %v359, 2.0
        %v394 = vmul.f32 %v364, 2.0
        %v395 = vmul.f32 %v369, 2.0
        %v396 = vmul.f32 %v374, 2.0
        %v397 = vmul.f32 %v379, 2.0
        %v398 = vmul.f32 %v384, 2.0
        %v399 = vmul.f32 %v389, 2.0
        %v400 = vmul.f32 %v222, %v222
        %v401 = vmul.f32 %v223, %v223
        %v402 = vmul.f32 %v224, %v224
        %v403 = vmul.f32 %v225, %v225
        %v404 = vmul.f32 %v226, %v226
        %v405 = vmul.f32 %v227, %v227
        %v406 = vmul.f32 %v228, %v228
        %v407 = vmul.f32 %v229, %v229
        %v408 = vsel %vm238, %v400, 0.0
        %409 = vadd.xlane.f32.xlu0 %v408
        %v410 = vpop.xlane.xlu0 %409
        %v411 = vsel %vm238, %v401, 0.0
        %412 = vadd.xlane.f32.xlu0 %v411
        %v413 = vpop.xlane.xlu0 %412
        %v414 = vsel %vm238, %v402, 0.0
        %415 = vadd.xlane.f32.xlu0 %v414
        %v416 = vpop.xlane.xlu0 %415
        %v417 = vsel %vm238, %v403, 0.0
        %418 = vadd.xlane.f32.xlu0 %v417
        %v419 = vpop.xlane.xlu0 %418
        %v420 = vsel %vm238, %v404, 0.0
        %421 = vadd.xlane.f32.xlu0 %v420
        %v422 = vpop.xlane.xlu0 %421
        %v423 = vsel %vm238, %v405, 0.0
        %424 = vadd.xlane.f32.xlu0 %v423
        %v425 = vpop.xlane.xlu0 %424
        %v426 = vsel %vm238, %v406, 0.0
        %427 = vadd.xlane.f32.xlu0 %v426
        %v428 = vpop.xlane.xlu0 %427
        %v429 = vsel %vm238, %v407, 0.0
        %430 = vadd.xlane.f32.xlu0 %v429
        %v431 = vpop.xlane.xlu0 %430
        %v432 = vmul.f32 %v230, %v230
        %v433 = vmul.f32 %v231, %v231
        %v434 = vmul.f32 %v232, %v232
        %v435 = vmul.f32 %v233, %v233
        %v436 = vmul.f32 %v234, %v234
        %v437 = vmul.f32 %v235, %v235
        %v438 = vmul.f32 %v236, %v236
        %v439 = vmul.f32 %v237, %v237
        %v441 = vsel %vm238, 1.0, 0
        %v444 = vsel %vm238, %v432, 0
        %v447 = vsel %vm238, %v433, 0
        %v450 = vsel %vm238, %v434, 0
        %v453 = vsel %vm238, %v435, 0
        %v456 = vsel %vm238, %v436, 0
        %v459 = vsel %vm238, %v437, 0
        %v462 = vsel %vm238, %v438, 0
        %v465 = vsel %vm238, %v439, 0
        %467 = vmatprep.subr.mxu0 0.0
        %468 = vmatpush1.xpose.msra.mxu0 %v444
        %469 = vmatprep.subr.mxu0 0.0
        %470 = vmatpush1.xpose.msra.mxu0 %v447
        %471 = vmatprep.subr.mxu0 0.0
        %472 = vmatpush1.xpose.msra.mxu0 %v450
        %473 = vmatprep.subr.mxu0 0.0
        %474 = vmatpush1.xpose.msra.mxu0 %v453
        %475 = vmatprep.subr.mxu0 0.0
        %476 = vmatpush1.xpose.msra.mxu0 %v456
        %477 = vmatprep.subr.mxu0 0.0
        %478 = vmatpush1.xpose.msra.mxu0 %v459
        %479 = vmatprep.subr.mxu0 0.0
        %480 = vmatpush1.xpose.msra.mxu0 %v462
        %481 = vmatprep.subr.mxu0 0.0
        %482 = vmatpush1.xpose.msra.mxu0 %v465
        %483 = vmatprep.subr.mxu0 0.0
        %484 = vmatpush1.xpose.msra.mxu0 0.0
        %485 = vmatprep.subr.mxu0 0.0
        %486 = vmatpush1.xpose.msra.mxu0 0.0
        %487 = vmatprep.subr.mxu0 0.0
        %488 = vmatpush1.xpose.msra.mxu0 0.0
        %489 = vmatprep.subr.mxu0 0.0
        %490 = vmatpush1.xpose.msra.mxu0 0.0
        %491 = vmatprep.subr.mxu0 0.0
        %492 = vmatpush1.xpose.msra.mxu0 0.0
        %493 = vmatprep.subr.mxu0 0.0
        %494 = vmatpush1.xpose.msra.mxu0 0.0
        %495 = vmatprep.subr.mxu0 0.0
        %496 = vmatpush1.xpose.msra.mxu0 0.0
        %497 = vmatprep.subr.mxu0 0.0
        %498 = vmatpush1.xpose.msra.mxu0 0.0
        %499 = vmatprep.subr.mxu0 0.0
        %500 = vmatpush1.xpose.msra.mxu0 0.0
        %501 = vmatprep.subr.mxu0 0.0
        %502 = vmatpush1.xpose.msra.mxu0 0.0
        %503 = vmatprep.subr.mxu0 0.0
        %504 = vmatpush1.xpose.msra.mxu0 0.0
        %505 = vmatprep.subr.mxu0 0.0
        %506 = vmatpush1.xpose.msra.mxu0 0.0
        %507 = vmatprep.subr.mxu0 0.0
        %508 = vmatpush1.xpose.msra.mxu0 0.0
        %509 = vmatprep.subr.mxu0 0.0
        %510 = vmatpush1.xpose.msra.mxu0 0.0
        %511 = vmatprep.subr.mxu0 0.0
        %512 = vmatpush1.xpose.msra.mxu0 0.0
        %513 = vmatprep.subr.mxu0 0.0
        %514 = vmatpush1.xpose.msra.mxu0 0.0
        %515 = vmatprep.subr.mxu0 0.0
        %516 = vmatpush1.xpose.msra.mxu0 0.0
        %517 = vmatprep.subr.mxu0 0.0
        %518 = vmatpush1.xpose.msra.mxu0 0.0
        %519 = vmatprep.subr.mxu0 0.0
        %520 = vmatpush1.xpose.msra.mxu0 0.0
        %521 = vmatprep.subr.mxu0 0.0
        %522 = vmatpush1.xpose.msra.mxu0 0.0
        %523 = vmatprep.subr.mxu0 0.0
        %524 = vmatpush1.xpose.msra.mxu0 0.0
        %525 = vmatprep.subr.mxu0 0.0
        %526 = vmatpush1.xpose.msra.mxu0 0.0
        %527 = vmatprep.subr.mxu0 0.0
        %528 = vmatpush1.xpose.msra.mxu0 0.0
        %529 = vmatprep.subr.mxu0 0.0
        %530 = vmatpush1.xpose.msra.mxu0 0.0
        %531 = vmatprep.mubr.f32.mxu0 0.0
        %532 = vmatmul.mubr.f32.gmra.mrb[0].mxu0 %v441
        %v533 = vpop.f32.mrb[0].mxu0
        %v534 = vadd.f32 0.0, %v533
        %v535 = vpop.f32.mrb[0].mxu0
        %536 = vdwg.mxu0
        %v537 = vsub.f32 %v392, %v410
        %v538 = vsub.f32 %v393, %v413
        %v539 = vsub.f32 %v394, %v416
        %v540 = vsub.f32 %v395, %v419
        %v541 = vsub.f32 %v396, %v422
        %v542 = vsub.f32 %v397, %v425
        %v543 = vsub.f32 %v398, %v428
        %v544 = vsub.f32 %v399, %v431
        %v545 = vlaneseq
        %v546 = vshrl.u32 %v545, 7
        %v547 = vsub.s32 0, %v546
        %v548 = vrot.slane %v534, %v547
        %v549 = vsub.f32 %v537, %v548
        %v550 = vsub.f32 %v538, %v548
        %v551 = vsub.f32 %v539, %v548
        %v552 = vsub.f32 %v540, %v548
        %v553 = vsub.f32 %v541, %v548
        %v554 = vsub.f32 %v542, %v548
        %v555 = vsub.f32 %v543, %v548
        %v556 = vsub.f32 %v544, %v548
        %vm557 = vcmask 523264
        %558 = vst.msk [vmem:[%s219] sm:$0xff] %vm557, %v549
        %559 = vst.msk [vmem:[%s219 + $0x8] sm:$0xff] %vm557, %v550
        %560 = vst.msk [vmem:[%s219 + $0x10] sm:$0xff] %vm557, %v551
        %561 = vst.msk [vmem:[%s219 + $0x18] sm:$0xff] %vm557, %v552
        %562 = vst.msk [vmem:[%s219 + $0x20] sm:$0xff] %vm557, %v553
        %563 = vst.msk [vmem:[%s219 + $0x28] sm:$0xff] %vm557, %v554
        %564 = vst.msk [vmem:[%s219 + $0x30] sm:$0xff] %vm557, %v555
        %565 = vst.msk [vmem:[%s219 + $0x38] sm:$0xff] %vm557, %v556
        %s566 = sand.u32 %s98, 1
        %s567 = scalar_lea.sflag [#allocation4], %s566
        %s568 = sand.u32 %s98, 1
        %s569 = smul.addr %s568, 64
        %s570 = scalar_lea.vmem [#allocation7], %s569
        // Predicated region
        $region37: #{tpu_custom_call.1} parent=27 // pred_check
          %p571 = pneg %p108
        $region38: #{tpu_custom_call.1} parent=27 // pred_check_branch
          %573 = sbr.rel (%p571) target = $region40
        $region39: #{tpu_custom_call.1} parent=27 // pred_region
          %s574 = smul.u32 8, %s27
          %s576 = ssub.s32 1024, 1024
          %577 = vsyncadd %s567, %s576
          %s578 = smul.addr %s26, 8
          %s579 = sadd.s32 %s574, %s578
          %s580 = smul.addr %s579, 128
          %s581 = scalar_lea.hbm %s2, %s580
          %s582 = sshll.u32 %s570, 4
          %s583 = int_to_ptr.vmem [resolvable:$true] %s582
          %588 = dma.vmem_to_hbm [thread:$0]  %s583, 1024, %s581, %s567, 128, 128, 8
        $region40: #{tpu_custom_call.1} parent=27 // pred_fallthru
          _
      $region28: #{tpu_custom_call.1} parent=5 // pred_fallthru
        _
      %p589 = scmp.le.s32.totalorder 2, %s17
      // Predicated region
      $region41: #{tpu_custom_call.1} parent=5 // pred_check
        %p590 = pneg %p589
      $region42: #{tpu_custom_call.1} parent=5 // pred_check_branch
        %592 = sbr.rel (%p590) target = $region44
      $region43: #{tpu_custom_call.1} parent=5 // pred_region
        %s593 = ssub.s32 %s17, 2
        // Predicated region
        $region45: #{tpu_custom_call.1} parent=43 // pred_check
          %p594 = pneg %p114
        $region46: #{tpu_custom_call.1} parent=43 // pred_check_branch
          %596 = sbr.rel (%p594) target = $region48
        $region47: #{tpu_custom_call.1} parent=43 // pred_region
          %s597 = sand.u32 %s99, 1
          %s598 = scalar_lea.sflag [#allocation4], %s597
          %s599 = sand.u32 %s99, 1
          %s600 = smul.addr %s599, 64
          %s601 = scalar_lea.vmem [#allocation7], %s600
          %602 = dma.done %s598, 1024
        $region48: #{tpu_custom_call.1} parent=43 // pred_fallthru
          _
      $region44: #{tpu_custom_call.1} parent=5 // pred_fallthru
        _
    $region6: #{tpu_custom_call.1} parent=1 // loop_footer
      %s21 = sadd.s32 1, %s17
    $region7: #{tpu_custom_call.1} parent=1 // loop_footer_branch
      %16 = sbr.rel target = $region3
    $region8: #{tpu_custom_call.1} parent=1 // loop_exit
      _
    %603 = vsyncpa [#allocation3], 1
    %s604 = scalar_lea.sflag [#allocation3], 1
    %605 = vsyncpa %s604, 1
    %606 = vsyncpa [#allocation6], 1
    %s607 = scalar_lea.sflag [#allocation6], 1
    %608 = vsyncpa %s607, 1
    %609 = vsyncpa [#allocation4], 1
    %s610 = scalar_lea.sflag [#allocation4], 1
    %611 = vsyncpa %s610, 1

</llo_original>
